<compile_context>
chip_gen: v6e
topology: v6e:2x2x1
jax: 0.10.0
libtpu: 0.0.40
codegen_flags: <defaults>
</compile_context>

<pallas_src>
import jax
import jax.numpy as jnp
from jax.experimental import pallas as pl
from jax.experimental.pallas import tpu as pltpu


HIDDEN = 64


def ppo_critic_kernel(x_ref, w1_ref, b1_ref, w2_ref, b2_ref, w3_ref, b3_ref, o_ref):
    # x_ref: (bm, S) f32  -> cast to bf16 in-kernel (VPU), MXU matmuls accumulate in f32.
    x = x_ref[...].astype(jnp.bfloat16)                                   # [bm, S] bf16
    h1 = jnp.tanh(
        jnp.dot(x, w1_ref[...], preferred_element_type=jnp.float32) + b1_ref[...]
    )                                                                     # [bm, 64] f32
    h2 = jnp.tanh(
        jnp.dot(h1.astype(jnp.bfloat16), w2_ref[...],
                preferred_element_type=jnp.float32) + b2_ref[...]
    )                                                                     # [bm, 64] f32
    # Value head: (1, 64) weight row broadcast-multiplied (VPU) + lane reduce (XLU).
    v = jnp.sum(h2 * w3_ref[...], axis=-1, keepdims=True) + b3_ref[...]   # [bm, 1] f32
    o_ref[...] = v.astype(o_ref.dtype)


def _round_up(x, m):
    return ((x + m - 1) // m) * m


def ppo_critic_forward(states, params, *, block_b=2048):
    """states: [B, state_dim] float32. params: dict of w1,b1,w2,b2,w3,b3.

    Returns [B, 1] float32 values (same semantics as PPOCritic.forward).
    """
    B, S = states.shape
    H = params["w1"].shape[1]

    # Batch tile: multiple of 8, capped at block_b and at ~half the batch so the grid
    # has >= 2 steps whenever B allows it (v7x megacore sharding via "parallel").
    half = _round_up(max((B + 1) // 2, 1), 8)
    bm = max(8, min(block_b, half))
    Bp = _round_up(B, bm)

    # Only pad the ragged tail (Bp - B < bm). When B % bm == 0 this is a no-op and the
    # f32 states go straight to the kernel (the bf16 cast happens in-kernel).
    xp = states if Bp == B else jnp.pad(states, ((0, Bp - B), (0, 0)))

    # bf16 MXU operands for the two hidden layers; biases and value head stay f32.
    w1 = params["w1"].astype(jnp.bfloat16)
    w2 = params["w2"].astype(jnp.bfloat16)
    b1, b2 = params["b1"], params["b2"]
    w3_row = params["w3"].reshape(1, H).astype(jnp.float32)   # (H, 1) -> (1, H)
    b3 = params["b3"].reshape(1, 1).astype(jnp.float32)

    resident = lambda shape: pl.BlockSpec(shape, lambda i: (0, 0))  # VMEM-resident params

    out = pl.pallas_call(
        ppo_critic_kernel,
        out_shape=jax.ShapeDtypeStruct((Bp, 1), jnp.float32),
        grid=(Bp // bm,),
        in_specs=[
            pl.BlockSpec((bm, S), lambda i: (i, 0)),   # states tile walks the batch axis
            resident(w1.shape), resident(b1.shape),
            resident(w2.shape), resident(b2.shape),
            resident(w3_row.shape), resident(b3.shape),
        ],
        out_specs=pl.BlockSpec((bm, 1), lambda i: (i, 0)),
        compiler_params=pltpu.CompilerParams(
            dimension_semantics=("parallel",),  # shards batch across TCs on v7x
        ),
    )(xp, w1, b1, w2, b2, w3_row, b3)

    return out if Bp == B else out[:B]


def init_params(key, state_dim, hidden=HIDDEN):
    # Deterministic synthetic init (roughly PyTorch's U(-1/sqrt(fan_in), 1/sqrt(fan_in))).
    # Weights are stored as (in_features, out_features): y = x @ W + b.
    ks = jax.random.split(key, 6)

    def lin(kw, kb, fan_in, fan_out):
        bound = 1.0 / jnp.sqrt(fan_in)
        w = jax.random.uniform(kw, (fan_in, fan_out), jnp.float32, -bound, bound)
        b = jax.random.uniform(kb, (1, fan_out), jnp.float32, -bound, bound)
        return w, b

    w1, b1 = lin(ks[0], ks[1], state_dim, hidden)
    w2, b2 = lin(ks[2], ks[3], hidden, hidden)
    w3, b3 = lin(ks[4], ks[5], hidden, 1)
    return {"w1": w1, "b1": b1, "w2": w2, "b2": b2, "w3": w3, "b3": b3}


def _reference_bf16(states, params):
    # Same bf16-operand / f32-accumulation math as the kernel.
    xb = states.astype(jnp.bfloat16)
    h1 = jnp.tanh(jnp.dot(xb, params["w1"].astype(jnp.bfloat16),
                          preferred_element_type=jnp.float32) + params["b1"])
    h2 = jnp.tanh(jnp.dot(h1.astype(jnp.bfloat16), params["w2"].astype(jnp.bfloat16),
                          preferred_element_type=jnp.float32) + params["b2"])
    return h2 @ params["w3"] + params["b3"]


def _reference_f32(states, params):
    h = jnp.tanh(states @ params["w1"] + params["b1"])
    h = jnp.tanh(h @ params["w2"] + params["b2"])
    return h @ params["w3"] + params["b3"]


if __name__ == "__main__":
    key = jax.random.PRNGKey(0)
    k_params, k_states, k_states2 = jax.random.split(key, 3)

    # Small shapes consistent with PPOCritic(state_shape=(32,)).
    B, STATE_DIM = 8, 32
    states = jax.random.normal(k_states, (B, STATE_DIM), dtype=jnp.float32)
    params = init_params(k_params, STATE_DIM)

    out = ppo_critic_forward(states, params)
    jax.block_until_ready(out)
    assert out.shape == (B, 1)
    assert jnp.allclose(out, _reference_bf16(states, params), atol=1e-3, rtol=1e-3)
    assert jnp.allclose(out, _reference_f32(states, params), atol=3e-2, rtol=3e-2)

    # Second check: ragged batch not a multiple of the tile -> multi-step grid + tail pad.
    B2 = 300
    states2 = jax.random.normal(k_states2, (B2, STATE_DIM), dtype=jnp.float32)
    out2 = ppo_critic_forward(states2, params)
    jax.block_until_ready(out2)
    assert out2.shape == (B2, 1)
    assert jnp.allclose(out2, _reference_bf16(states2, params), atol=1e-3, rtol=1e-3)
    assert jnp.allclose(out2, _reference_f32(states2, params), atol=3e-2, rtol=3e-2)

    print("KERNEL_OK")
</pallas_src>

<mosaic_0001>
module attributes {stable_mosaic.version = 11 : i64} {
  func.func @ppo_critic_kernel(%arg0: i32, %arg1: memref<8x32xf32, #tpu.memory_space<vmem>>, %arg2: memref<32x64xbf16, #tpu.memory_space<vmem>>, %arg3: memref<1x64xf32, #tpu.memory_space<vmem>>, %arg4: memref<64x64xbf16, #tpu.memory_space<vmem>>, %arg5: memref<1x64xf32, #tpu.memory_space<vmem>>, %arg6: memref<1x64xf32, #tpu.memory_space<vmem>>, %arg7: memref<1x1xf32, #tpu.memory_space<vmem>>, %arg8: memref<8x1xf32, #tpu.memory_space<vmem>>) attributes {dimension_semantics = [#tpu.dimension_semantics<parallel>], iteration_bounds = array<i64: 1>, scalar_prefetch = 0 : i64, scratch_operands = 0 : i64, tpu.core_type = #tpu.core_type<tc>, window_params = [{transform_indices = @transform_0, window_bounds = array<i64: 8, 32>}, {pipeline_mode = #tpu.pipeline_mode<synchronous>, transform_indices = @transform_1, window_bounds = array<i64: 32, 64>}, {pipeline_mode = #tpu.pipeline_mode<synchronous>, transform_indices = @transform_2, window_bounds = array<i64: 1, 64>}, {pipeline_mode = #tpu.pipeline_mode<synchronous>, transform_indices = @transform_3, window_bounds = array<i64: 64, 64>}, {pipeline_mode = #tpu.pipeline_mode<synchronous>, transform_indices = @transform_4, window_bounds = array<i64: 1, 64>}, {pipeline_mode = #tpu.pipeline_mode<synchronous>, transform_indices = @transform_5, window_bounds = array<i64: 1, 64>}, {pipeline_mode = #tpu.pipeline_mode<synchronous>, transform_indices = @transform_6, window_bounds = array<i64: 1, 1>}, {transform_indices = @transform_7, window_bounds = array<i64: 8, 1>}]} {
    %c0 = arith.constant 0 : index
    %c0_0 = arith.constant 0 : index
    %0 = vector.load %arg1[%c0, %c0_0] : memref<8x32xf32, #tpu.memory_space<vmem>>, vector<8x32xf32>
    %1 = arith.truncf %0 : vector<8x32xf32> to vector<8x32xbf16>
    %c0_1 = arith.constant 0 : index
    %c0_2 = arith.constant 0 : index
    %2 = vector.load %arg2[%c0_1, %c0_2] : memref<32x64xbf16, #tpu.memory_space<vmem>>, vector<32x64xbf16>
    %cst = arith.constant dense<0.000000e+00> : vector<8x64xf32>
    %3 = tpu.matmul %1, %2, %cst {dimension_numbers = #tpu.dot_dimension_numbers<[1], [0], [0], [1], [0, 0, 1, 1], [], []>} : vector<8x32xbf16>, vector<32x64xbf16>, vector<8x64xf32> -> vector<8x64xf32>
    %c0_3 = arith.constant 0 : index
    %c0_4 = arith.constant 0 : index
    %4 = vector.load %arg3[%c0_3, %c0_4] : memref<1x64xf32, #tpu.memory_space<vmem>>, vector<1x64xf32>
    %5 = vector.broadcast %4 : vector<1x64xf32> to vector<8x64xf32>
    %6 = arith.addf %3, %5 : vector<8x64xf32>
    %7 = math.tanh %6 : vector<8x64xf32>
    %8 = arith.truncf %7 : vector<8x64xf32> to vector<8x64xbf16>
    %c0_5 = arith.constant 0 : index
    %c0_6 = arith.constant 0 : index
    %9 = vector.load %arg4[%c0_5, %c0_6] : memref<64x64xbf16, #tpu.memory_space<vmem>>, vector<64x64xbf16>
    %cst_7 = arith.constant dense<0.000000e+00> : vector<8x64xf32>
    %10 = tpu.matmul %8, %9, %cst_7 {dimension_numbers = #tpu.dot_dimension_numbers<[1], [0], [0], [1], [0, 0, 1, 1], [], []>} : vector<8x64xbf16>, vector<64x64xbf16>, vector<8x64xf32> -> vector<8x64xf32>
    %c0_8 = arith.constant 0 : index
    %c0_9 = arith.constant 0 : index
    %11 = vector.load %arg5[%c0_8, %c0_9] : memref<1x64xf32, #tpu.memory_space<vmem>>, vector<1x64xf32>
    %12 = vector.broadcast %11 : vector<1x64xf32> to vector<8x64xf32>
    %13 = arith.addf %10, %12 : vector<8x64xf32>
    %14 = math.tanh %13 : vector<8x64xf32>
    %c0_10 = arith.constant 0 : index
    %c0_11 = arith.constant 0 : index
    %15 = vector.load %arg6[%c0_10, %c0_11] : memref<1x64xf32, #tpu.memory_space<vmem>>, vector<1x64xf32>
    %16 = vector.broadcast %15 : vector<1x64xf32> to vector<8x64xf32>
    %17 = arith.mulf %14, %16 : vector<8x64xf32>
    %cst_12 = arith.constant dense<0.000000e+00> : vector<8xf32>
    %18 = vector.multi_reduction <add>, %17, %cst_12 [1] : vector<8x64xf32> to vector<8xf32>
    %19 = vector.shape_cast %18 : vector<8xf32> to vector<8x1xf32>
    %c0_13 = arith.constant 0 : index
    %c0_14 = arith.constant 0 : index
    %20 = vector.load %arg7[%c0_13, %c0_14] : memref<1x1xf32, #tpu.memory_space<vmem>>, vector<1x1xf32>
    %21 = vector.broadcast %20 : vector<1x1xf32> to vector<8x1xf32>
    %22 = arith.addf %19, %21 : vector<8x1xf32>
    %c0_15 = arith.constant 0 : index
    %c0_16 = arith.constant 0 : index
    %23 = vector.load %arg8[%c0_15, %c0_16] : memref<8x1xf32, #tpu.memory_space<vmem>>, vector<8x1xf32>
    tpu.vector_store %arg8[%c0_15, %c0_16], %22 {strides = array<i32>} : memref<8x1xf32, #tpu.memory_space<vmem>>, vector<8x1xf32>,
    return
  }
  func.func @transform_0(%arg0: i32) -> (i32, i32) {
    %c0_i32 = arith.constant 0 : i32
    %c0_i32_0 = arith.constant 0 : i32
    return %arg0, %c0_i32 : i32, i32
  }
  func.func @transform_1(%arg0: i32) -> (i32, i32) {
    %c0_i32 = arith.constant 0 : i32
    %c0_i32_0 = arith.constant 0 : i32
    %c0_i32_1 = arith.constant 0 : i32
    return %c0_i32, %c0_i32_0 : i32, i32
  }
  func.func @transform_2(%arg0: i32) -> (i32, i32) {
    %c0_i32 = arith.constant 0 : i32
    %c0_i32_0 = arith.constant 0 : i32
    %c0_i32_1 = arith.constant 0 : i32
    return %c0_i32, %c0_i32_0 : i32, i32
  }
  func.func @transform_3(%arg0: i32) -> (i32, i32) {
    %c0_i32 = arith.constant 0 : i32
    %c0_i32_0 = arith.constant 0 : i32
    %c0_i32_1 = arith.constant 0 : i32
    return %c0_i32, %c0_i32_0 : i32, i32
  }
  func.func @transform_4(%arg0: i32) -> (i32, i32) {
    %c0_i32 = arith.constant 0 : i32
    %c0_i32_0 = arith.constant 0 : i32
    %c0_i32_1 = arith.constant 0 : i32
    return %c0_i32, %c0_i32_0 : i32, i32
  }
  func.func @transform_5(%arg0: i32) -> (i32, i32) {
    %c0_i32 = arith.constant 0 : i32
    %c0_i32_0 = arith.constant 0 : i32
    %c0_i32_1 = arith.constant 0 : i32
    return %c0_i32, %c0_i32_0 : i32, i32
  }
  func.func @transform_6(%arg0: i32) -> (i32, i32) {
    %c0_i32 = arith.constant 0 : i32
    %c0_i32_0 = arith.constant 0 : i32
    %c0_i32_1 = arith.constant 0 : i32
    return %c0_i32, %c0_i32_0 : i32, i32
  }
  func.func @transform_7(%arg0: i32) -> (i32, i32) {
    %c0_i32 = arith.constant 0 : i32
    %c0_i32_0 = arith.constant 0 : i32
    return %arg0, %c0_i32 : i32, i32
  }
}

</mosaic_0001>

<llo_original>
// kernel: tpu_custom_call.1
$region0: #{tpu_custom_call.1}
  #allocation0 [shape = 'u32[]', space=smem, size = 0x4, offset = 0x4, fixed_abs, tag = 'smem constant byte address 0x4 - core index']
  #allocation1 [shape = 'u32[144,128]{1,0:T(1,128)}', space=vmem, size = 0x12000, scoped, tag = 'internal scratch']
  #allocation2 [shape = 'f32[1,1]{1,0:T(1,128)S(1)}', space=vmem, size = 0x200, scoped, tag = 'scoped memory for tpu_custom_call.1']
  %s0 = inlined_call_operand.hbm [shape: f32[8,32], index: 0, kind: input, shape index: {}]
  %s1 = inlined_call_operand.hbm [shape: bf16[32,64], index: 1, kind: input, shape index: {}]
  %s2 = inlined_call_operand.vmem [shape: f32[1,64], index: 2, kind: input, shape index: {}]
  %s3 = inlined_call_operand.hbm [shape: bf16[64,64], index: 3, kind: input, shape index: {}]
  %s4 = inlined_call_operand.vmem [shape: f32[1,64], index: 4, kind: input, shape index: {}]
  %s5 = inlined_call_operand.vmem [shape: f32[1,64], index: 5, kind: input, shape index: {}]
  %s6 = inlined_call_operand.<no memory space> [shape: f32[1,1], index: 6, kind: input, shape index: {}]
  %s7 = inlined_call_operand.vmem [shape: f32[8,1], index: 7, kind: output, shape index: {}]
  %s8 = sld [smem:[#allocation0]]
  $region50: #{tpu_custom_call.1} parent=0
    _
  %s10 = ssub.s32 1, %s8
  %s11 = scalar_select 0, %s10, %s8
  %v12 = vstv %s6
  %13 = vst [vmem:[#allocation2] sm:$0x1] %v12
  $region1: #{tpu_custom_call.1} parent=0
    #allocation3 [shape = 'u8[4096]{0}', space=vmem, size = 0x1000, scoped, tag = 'input window, operand 0, single buffered']
    #allocation4 [shape = 's32[1]{0}', space=sflag, size = 0x4, scoped, tag = 'scoped memory for tpu_custom_call.1']
    #allocation5 [shape = 'u8[8192]{0}', space=vmem, size = 0x2000, scoped, tag = 'input window, operand 1, single buffered']
    #allocation6 [shape = 's32[1]{0}', space=sflag, size = 0x4, scoped, tag = 'scoped memory for tpu_custom_call.1']
    #allocation7 [shape = 'u8[16384]{0}', space=vmem, size = 0x4000, scoped, tag = 'input window, operand 3, single buffered']
    %14 = vsyncpa [#allocation4], 0
    %15 = vsyncpa [#allocation6], 0
    // Predicated region
    $region2: #{tpu_custom_call.1} parent=1 // pred_check
      _
    $region3: #{tpu_custom_call.1} parent=1 // pred_check_branch
      %17 = sbr.rel (0) target = $region5
    $region4: #{tpu_custom_call.1} parent=1 // pred_region
      %s19 = ssub.s32 128, 128
      %20 = vsyncadd [#allocation4], %s19
      %s22 = sshll.u32 [#allocation3], 4
      %s23 = int_to_ptr.vmem [resolvable:$true] %s22
      %25 = dma.hbm_to_vmem [thread:$0]  %s0, 128, %s23, [#allocation4]
    $region5: #{tpu_custom_call.1} parent=1 // pred_fallthru
      _
    // Predicated region
    $region6: #{tpu_custom_call.1} parent=1 // pred_check
      _
    $region7: #{tpu_custom_call.1} parent=1 // pred_check_branch
      %27 = sbr.rel (0) target = $region9
    $region8: #{tpu_custom_call.1} parent=1 // pred_region
      %s29 = ssub.s32 256, 256
      %30 = vsyncadd [#allocation6], %s29
      %s31 = sshll.u32 [#allocation5], 4
      %s32 = int_to_ptr.vmem [resolvable:$true] %s31
      %37 = dma.hbm_to_vmem [thread:$0]  %s1, 256, %s32, [#allocation6], 64, 64, 4
    $region9: #{tpu_custom_call.1} parent=1 // pred_fallthru
      _
    // Predicated region
    $region10: #{tpu_custom_call.1} parent=1 // pred_check
      _
    $region11: #{tpu_custom_call.1} parent=1 // pred_check_branch
      %39 = sbr.rel (0) target = $region13
    $region12: #{tpu_custom_call.1} parent=1 // pred_region
      _
    $region13: #{tpu_custom_call.1} parent=1 // pred_fallthru
      _
    // Predicated region
    $region14: #{tpu_custom_call.1} parent=1 // pred_check
      _
    $region15: #{tpu_custom_call.1} parent=1 // pred_check_branch
      %41 = sbr.rel (0) target = $region17
    $region16: #{tpu_custom_call.1} parent=1 // pred_region
      %s43 = ssub.s32 512, 512
      %44 = vsyncadd [#allocation6], %s43
      %s45 = sshll.u32 [#allocation7], 4
      %s46 = int_to_ptr.vmem [resolvable:$true] %s45
      %51 = dma.hbm_to_vmem [thread:$0]  %s3, 512, %s46, [#allocation6], 64, 64, 4
    $region17: #{tpu_custom_call.1} parent=1 // pred_fallthru
      _
    // Predicated region
    $region18: #{tpu_custom_call.1} parent=1 // pred_check
      _
    $region19: #{tpu_custom_call.1} parent=1 // pred_check_branch
      %53 = sbr.rel (0) target = $region21
    $region20: #{tpu_custom_call.1} parent=1 // pred_region
      _
    $region21: #{tpu_custom_call.1} parent=1 // pred_fallthru
      _
    // Predicated region
    $region22: #{tpu_custom_call.1} parent=1 // pred_check
      _
    $region23: #{tpu_custom_call.1} parent=1 // pred_check_branch
      %55 = sbr.rel (0) target = $region25
    $region24: #{tpu_custom_call.1} parent=1 // pred_region
      _
    $region25: #{tpu_custom_call.1} parent=1 // pred_fallthru
      _
    // Predicated region
    $region26: #{tpu_custom_call.1} parent=1 // pred_check
      _
    $region27: #{tpu_custom_call.1} parent=1 // pred_check_branch
      %57 = sbr.rel (0) target = $region29
    $region28: #{tpu_custom_call.1} parent=1 // pred_region
      _
    $region29: #{tpu_custom_call.1} parent=1 // pred_fallthru
      _
    // Predicated region
    $region30: #{tpu_custom_call.1} parent=1 // pred_check
      _
    $region31: #{tpu_custom_call.1} parent=1 // pred_check_branch
      %59 = sbr.rel (0) target = $region33
    $region32: #{tpu_custom_call.1} parent=1 // pred_region
      %60 = dma.done [#allocation4], 128
    $region33: #{tpu_custom_call.1} parent=1 // pred_fallthru
      _
    // Predicated region
    $region34: #{tpu_custom_call.1} parent=1 // pred_check
      _
    $region35: #{tpu_custom_call.1} parent=1 // pred_check_branch
      %62 = sbr.rel (0) target = $region37
    $region36: #{tpu_custom_call.1} parent=1 // pred_region
      %63 = dma.done [#allocation6], 256
    $region37: #{tpu_custom_call.1} parent=1 // pred_fallthru
      _
    // Predicated region
    $region38: #{tpu_custom_call.1} parent=1 // pred_check
      _
    $region39: #{tpu_custom_call.1} parent=1 // pred_check_branch
      %65 = sbr.rel (0) target = $region41
    $region40: #{tpu_custom_call.1} parent=1 // pred_region
      %66 = dma.done [#allocation6], 512
    $region41: #{tpu_custom_call.1} parent=1 // pred_fallthru
      _
    %v68 = vld [vmem:[#allocation3] sm:$0xff]
    %v69 = vpack.c.bf16 %v68, %v68
    %v70 = vld [vmem:[#allocation5] sm:$0xf]
    %v71 = vld [vmem:[#allocation5 + $0x4] sm:$0xf]
    %v72 = vld [vmem:[#allocation5 + $0x8] sm:$0xf]
    %v73 = vld [vmem:[#allocation5 + $0xc] sm:$0xf]
    %v74 = vld [vmem:[%s2] sm:$0x1]
    %v76 = vlaneseq
    %v77 = vshrl.u32 %v76, 7
    %v78 = vsub.s32 0, %v77
    %v79 = vrot.slane %v74, %v78
    %v85 = vunpack.c.l.b16 %v70
    %v86 = vunpack.c.l.b16 %v71
    %v87 = vunpack.c.l.b16 %v72
    %v88 = vunpack.c.l.b16 %v73
    %v89 = vpack.c.b16 %v86, %v85
    %v90 = vpack.c.b16 %v88, %v87
    %vm93 = vcmask 261120
    %v95 = vsel %vm93, %v69, 0
    %97 = vmatprep.subr.bf16.mxu0 0
    %98 = vmatpush1.bf16.msra.mxu0 0
    %99 = vmatprep.subr.bf16.mxu0 0
    %100 = vmatpush1.bf16.msra.mxu0 0
    %101 = vmatprep.subr.bf16.mxu0 0
    %102 = vmatpush1.bf16.msra.mxu0 0
    %103 = vmatprep.subr.bf16.mxu0 0
    %104 = vmatpush1.bf16.msra.mxu0 0
    %105 = vmatprep.subr.bf16.mxu0 0
    %106 = vmatpush1.bf16.msra.mxu0 0
    %107 = vmatprep.subr.bf16.mxu0 0
    %108 = vmatpush1.bf16.msra.mxu0 0
    %109 = vmatprep.subr.bf16.mxu0 0
    %110 = vmatpush1.bf16.msra.mxu0 %v90
    %111 = vmatprep.subr.bf16.mxu0 0
    %112 = vmatpush1.bf16.msra.mxu0 %v89
    %113 = vmatprep.subr.bf16.mxu0 0
    %114 = vmatpush2.bf16.msra.mxu0 0
    %115 = vmatprep.subr.bf16.mxu0 0
    %116 = vmatpush2.bf16.msra.mxu0 0
    %117 = vmatprep.subr.bf16.mxu0 0
    %118 = vmatpush2.bf16.msra.mxu0 0
    %119 = vmatprep.subr.bf16.mxu0 0
    %120 = vmatpush2.bf16.msra.mxu0 0
    %121 = vmatprep.subr.bf16.mxu0 0
    %122 = vmatpush2.bf16.msra.mxu0 0
    %123 = vmatprep.subr.bf16.mxu0 0
    %124 = vmatpush2.bf16.msra.mxu0 0
    %125 = vmatprep.subr.bf16.mxu0 0
    %126 = vmatpush2.bf16.msra.mxu0 0
    %127 = vmatprep.subr.bf16.mxu0 0
    %128 = vmatpush2.bf16.msra.mxu0 0
    %129 = vmatprep.mubr.bf16.mxu0 0
    %130 = vmatmul.mubr.bf16.gmra.mxu0 %v95
    %v131 = vpop.f32.mrf.mxu0
    %v132 = vadd.f32 %v79, %v131
    %v133 = vpop.f32.mrf.mxu0
    %v134 = vpop.f32.mrf.mxu0
    %v135 = vpop.f32.mrf.mxu0
    %136 = vdwg.mxu0
    %v137 = vtanh.pop %v132
    %v138 = vpack.c.bf16 %v137, %v137
    %v139 = vld [vmem:[#allocation7] sm:$0xf]
    %v140 = vld [vmem:[#allocation7 + $0x4] sm:$0xf]
    %v141 = vld [vmem:[#allocation7 + $0x8] sm:$0xf]
    %v142 = vld [vmem:[#allocation7 + $0xc] sm:$0xf]
    %v143 = vld [vmem:[#allocation7 + $0x10] sm:$0xf]
    %v144 = vld [vmem:[#allocation7 + $0x14] sm:$0xf]
    %v145 = vld [vmem:[#allocation7 + $0x18] sm:$0xf]
    %v146 = vld [vmem:[#allocation7 + $0x1c] sm:$0xf]
    %v147 = vld [vmem:[%s4] sm:$0x1]
    %v149 = vlaneseq
    %v150 = vshrl.u32 %v149, 7
    %v151 = vsub.s32 0, %v150
    %v152 = vrot.slane %v147, %v151
    %v162 = vunpack.c.l.b16 %v139
    %v163 = vunpack.c.l.b16 %v140
    %v164 = vunpack.c.l.b16 %v141
    %v165 = vunpack.c.l.b16 %v142
    %v166 = vunpack.c.l.b16 %v143
    %v167 = vunpack.c.l.b16 %v144
    %v168 = vunpack.c.l.b16 %v145
    %v169 = vunpack.c.l.b16 %v146
    %v170 = vpack.c.b16 %v163, %v162
    %v171 = vpack.c.b16 %v165, %v164
    %v172 = vpack.c.b16 %v167, %v166
    %v173 = vpack.c.b16 %v169, %v168
    %vm178 = vcmask 523264
    %v180 = vsel %vm178, %v138, 0
    %182 = vmatprep.subr.bf16.mxu0 0
    %183 = vmatpush1.bf16.msra.mxu0 0
    %184 = vmatprep.subr.bf16.mxu0 0
    %185 = vmatpush1.bf16.msra.mxu0 0
    %186 = vmatprep.subr.bf16.mxu0 0
    %187 = vmatpush1.bf16.msra.mxu0 0
    %188 = vmatprep.subr.bf16.mxu0 0
    %189 = vmatpush1.bf16.msra.mxu0 0
    %190 = vmatprep.subr.bf16.mxu0 0
    %191 = vmatpush1.bf16.msra.mxu0 %v173
    %192 = vmatprep.subr.bf16.mxu0 0
    %193 = vmatpush1.bf16.msra.mxu0 %v172
    %194 = vmatprep.subr.bf16.mxu0 0
    %195 = vmatpush1.bf16.msra.mxu0 %v171
    %196 = vmatprep.subr.bf16.mxu0 0
    %197 = vmatpush1.bf16.msra.mxu0 %v170
    %198 = vmatprep.subr.bf16.mxu0 0
    %199 = vmatpush2.bf16.msra.mxu0 0
    %200 = vmatprep.subr.bf16.mxu0 0
    %201 = vmatpush2.bf16.msra.mxu0 0
    %202 = vmatprep.subr.bf16.mxu0 0
    %203 = vmatpush2.bf16.msra.mxu0 0
    %204 = vmatprep.subr.bf16.mxu0 0
    %205 = vmatpush2.bf16.msra.mxu0 0
    %206 = vmatprep.subr.bf16.mxu0 0
    %207 = vmatpush2.bf16.msra.mxu0 0
    %208 = vmatprep.subr.bf16.mxu0 0
    %209 = vmatpush2.bf16.msra.mxu0 0
    %210 = vmatprep.subr.bf16.mxu0 0
    %211 = vmatpush2.bf16.msra.mxu0 0
    %212 = vmatprep.subr.bf16.mxu0 0
    %213 = vmatpush2.bf16.msra.mxu0 0
    %214 = vmatprep.mubr.bf16.mxu0 0
    %215 = vmatmul.mubr.bf16.gmra.mxu0 %v180
    %v216 = vpop.f32.mrf.mxu0
    %v217 = vadd.f32 %v152, %v216
    %v218 = vpop.f32.mrf.mxu0
    %v219 = vpop.f32.mrf.mxu0
    %v220 = vpop.f32.mrf.mxu0
    %221 = vdwg.mxu0
    %v222 = vtanh.pop %v217
    %v223 = vld [vmem:[%s5] sm:$0x1]
    %v225 = vlaneseq
    %v226 = vshrl.u32 %v225, 7
    %v227 = vsub.s32 0, %v226
    %v228 = vrot.slane %v223, %v227
    %v230 = vmul.f32 %v222, %v228
    %v231 = vsel %vm178, %v230, 0.0
    %232 = vadd.xlane.f32.xlu0 %v231
    %v233 = vpop.xlane.xlu0 %232
    %v234 = vld [vmem:[#allocation2] sm:$0x1]
    %v236 = vlaneseq
    %v237 = vshrl.u32 %v236, 7
    %v238 = vsub.s32 0, %v237
    %v239 = vrot.slane %v234, %v238
    %v241 = vadd.f32 %v233, %v239
    %vm242 = vcmask 7168
    %243 = vst.msk [vmem:[%s7] sm:$0xff] %vm242, %v241
    // Predicated region
    $region42: #{tpu_custom_call.1} parent=1 // pred_check
      _
    $region43: #{tpu_custom_call.1} parent=1 // pred_check_branch
      %245 = sbr.rel (0) target = $region45
    $region44: #{tpu_custom_call.1} parent=1 // pred_region
      _
    $region45: #{tpu_custom_call.1} parent=1 // pred_fallthru
      _
    // Predicated region
    $region46: #{tpu_custom_call.1} parent=1 // pred_check
      _
    $region47: #{tpu_custom_call.1} parent=1 // pred_check_branch
      %247 = sbr.rel (0) target = $region49
    $region48: #{tpu_custom_call.1} parent=1 // pred_region
      _
    $region49: #{tpu_custom_call.1} parent=1 // pred_fallthru
      _
    %248 = vsyncpa [#allocation4], 1
    %249 = vsyncpa [#allocation6], 1

</llo_original>
